<compile_context>
chip_gen: v6e
topology: v6e:2x2x1
jax: 0.10.0
libtpu: 0.0.40
codegen_flags: <defaults>
</compile_context>

<pallas_src>
import functools

import jax
import jax.numpy as jnp
from jax import lax
from jax.experimental import pallas as pl
from jax.experimental.pallas import tpu as pltpu

ALPHA = 0.25
GAMMA = 2.0


# --------------------------------------------------------------------------- #
# Kernel body
# --------------------------------------------------------------------------- #
def _focal_loss_kernel(p_ref, t_ref, o_ref, *, alpha, gamma, binary_targets):
    # Native-dtype I/O; math in f32.
    p = p_ref[...].astype(jnp.float32)
    t = t_ref[...].astype(jnp.float32)
    one = jnp.float32(1.0)

    one_minus_p = one - p
    # p_t = p*t + (1-p)*(1-t) in linear form: (1-p) + (2p-1)*t  (reuses 1-p).
    p_t = one_minus_p + (p - one_minus_p) * t

    if binary_targets:
        # Fast path (valid ONLY for hard targets in {0,1}): BCE == -log(p_t).
        neg_ce = jnp.maximum(jnp.log(p_t), -100.0)              # == -BCE
    else:
        one_minus_t = one - t
        log_p = jnp.maximum(jnp.log(p), -100.0)                 # BCE log clamp
        log_1mp = jnp.maximum(jnp.log(one_minus_p), -100.0)
        neg_ce = t * log_p + one_minus_t * log_1mp              # == -BCE

    # (1 - p_t) ** gamma modulator.
    if gamma == 2.0:
        mod = jnp.square(one - p_t)                # VALU only, keeps EUP free
    elif float(gamma) == int(gamma) and gamma >= 0:
        mod = lax.integer_pow(one - p_t, int(gamma))
    else:
        mod = jnp.power(one - p_t, jnp.float32(gamma))

    if alpha >= 0:
        # loss = alpha_t * BCE * mod; fold the BCE negation into the constant
        # alpha_t coefficients:  -(alpha_t) = (alpha - 1) + (1 - 2*alpha) * t.
        neg_alpha_t = jnp.float32(alpha - 1.0) + jnp.float32(1.0 - 2.0 * alpha) * t
        loss = (neg_ce * neg_alpha_t) * mod
    else:
        loss = (-neg_ce) * mod

    o_ref[...] = loss.astype(o_ref.dtype)


# --------------------------------------------------------------------------- #
# Wrapper helpers
# --------------------------------------------------------------------------- #
def _target_block_elems() -> int:
    """Generation-aware per-buffer block size (elements).

    v5e (16 MiB default scoped VMEM): 512K elems -> 3 bufs x 2 stages x 2 MiB = 12 MiB.
    v6e / v7x (32 MiB default scoped): 1M elems -> 24 MiB, no vmem_limit override.
    """
    try:
        kind = jax.devices()[0].device_kind.lower()
    except Exception:
        kind = ""
    if ("v2" in kind) or ("v3" in kind) or ("v4" in kind) or ("v5" in kind):
        return 512 * 1024
    return 1024 * 1024


def _pick_lanes(n: int):
    """Largest lane width in {1024..128} dividing n, preferring widths that
    leave >= 32 rows so the grid can be split into >= 4 pipelined steps."""
    divisible = [l for l in (1024, 512, 256, 128) if n % l == 0]
    if not divisible:
        return None
    for l in divisible:
        if n // l >= 32:
            return l
    return divisible[0]


def _focal_loss_2d(p2, t2, *, alpha, gamma, binary_targets, out_dtype):
    rows, lanes = p2.shape
    out_itemsize = jnp.dtype(out_dtype).itemsize
    # dtype-dependent sublane tile: 8 for f32, 16 for bf16, 32 for int8/fp8.
    sublane = max(8, 32 // max(out_itemsize, 1))

    target_rows = max(sublane, (_target_block_elems() // lanes) // sublane * sublane)
    if rows > target_rows:
        block_rows = target_rows
    elif rows >= 4 * sublane:
        # Small/medium input: force >= 4 grid steps so DMA/compute/writeback
        # overlap and both v7x TensorCores get blocks.
        block_rows = max(sublane, (pl.cdiv(rows, 4) // sublane) * sublane)
    else:
        block_rows = rows            # tiny input: single full-extent block
    grid = (pl.cdiv(rows, block_rows),)   # ragged last block handled by Pallas

    n = rows * lanes
    cost = pl.CostEstimate(
        flops=20 * n,
        transcendentals=(1 if binary_targets else 2) * n,
        bytes_accessed=n * (p2.dtype.itemsize + t2.dtype.itemsize + out_itemsize),
    )

    kernel = functools.partial(_focal_loss_kernel, alpha=alpha, gamma=gamma,
                               binary_targets=binary_targets)
    return pl.pallas_call(
        kernel,
        out_shape=jax.ShapeDtypeStruct((rows, lanes), out_dtype),
        grid_spec=pltpu.PrefetchScalarGridSpec(
            num_scalar_prefetch=0,
            grid=grid,
            in_specs=[
                pl.BlockSpec((block_rows, lanes), lambda i: (i, 0)),
                pl.BlockSpec((block_rows, lanes), lambda i: (i, 0)),
            ],
            out_specs=pl.BlockSpec((block_rows, lanes), lambda i: (i, 0)),
        ),
        compiler_params=pltpu.CompilerParams(
            dimension_semantics=("parallel",)),
        cost_estimate=cost,
    )(p2, t2)


def _focal_loss_xla(p, t, *, alpha, gamma):
    """Plain-XLA fallback (used for the <128-element ragged tail / reference)."""
    p = p.astype(jnp.float32)
    t = t.astype(jnp.float32)
    ce = -(t * jnp.maximum(jnp.log(p), -100.0)
           + (1.0 - t) * jnp.maximum(jnp.log(1.0 - p), -100.0))
    p_t = p * t + (1.0 - p) * (1.0 - t)
    loss = ce * (1.0 - p_t) ** gamma
    if alpha >= 0:
        loss = (alpha * t + (1.0 - alpha) * (1.0 - t)) * loss
    return loss


# --------------------------------------------------------------------------- #
# Public entry point
# --------------------------------------------------------------------------- #
def focal_loss(inputs: jax.Array, targets: jax.Array,
               alpha: float = ALPHA, gamma: float = GAMMA,
               reduction: str = "none", binary_targets: bool = False) -> jax.Array:
    """Focal loss matching FocalLoss.forward (dynamic_alpha=False).

    `inputs` are probabilities in [0, 1] (the PyTorch module applies
    F.binary_cross_entropy directly to them).
    """
    # TODO(synk): dynamic_alpha=True (data-dependent alpha) is not implemented
    # in-kernel; it would need a scalar-prefetch alpha computed from targets.
    orig_shape = inputs.shape
    out_dtype = inputs.dtype
    n = inputs.size

    p_flat = inputs.reshape(-1)   # contiguous reshape: free
    t_flat = targets.reshape(-1)

    lanes = _pick_lanes(n)
    if lanes is None:
        # Rare ragged case (n % 128 != 0): kernel on the multiple-of-128 prefix,
        # tiny tail (<128 elems) in plain XLA -- no full-array pad / slice copy.
        # TODO(synk): fold the tail into the main kernel as a masked final grid
        # step to also avoid the prefix-slice / concat copies.
        m = (n // 128) * 128
        pieces = []
        if m:
            lanes_m = _pick_lanes(m)
            head = _focal_loss_2d(p_flat[:m].reshape(-1, lanes_m),
                                  t_flat[:m].reshape(-1, lanes_m),
                                  alpha=alpha, gamma=gamma,
                                  binary_targets=binary_targets,
                                  out_dtype=out_dtype).reshape(-1)
            pieces.append(head)
        tail = _focal_loss_xla(p_flat[m:], t_flat[m:],
                               alpha=alpha, gamma=gamma).astype(out_dtype)
        pieces.append(tail)
        out = jnp.concatenate(pieces) if len(pieces) > 1 else pieces[0]
        loss = out.reshape(orig_shape)
    else:
        rows = n // lanes
        out2 = _focal_loss_2d(p_flat.reshape(rows, lanes),
                              t_flat.reshape(rows, lanes),
                              alpha=alpha, gamma=gamma,
                              binary_targets=binary_targets,
                              out_dtype=out_dtype)
        loss = out2.reshape(orig_shape)

    if reduction == "mean":
        return loss.mean()
    if reduction == "sum":
        return loss.sum()
    return loss


def _focal_loss_ref(inputs, targets, alpha=ALPHA, gamma=GAMMA):
    return _focal_loss_xla(inputs, targets, alpha=alpha, gamma=gamma).astype(inputs.dtype)


# --------------------------------------------------------------------------- #
# Self-test
# --------------------------------------------------------------------------- #
if __name__ == "__main__":
    key = jax.random.PRNGKey(0)

    def make_case(k, shape):
        k1, k2 = jax.random.split(k)
        # Inputs are probabilities (the module applies binary_cross_entropy directly).
        p = jax.nn.sigmoid(jax.random.normal(k1, shape, dtype=jnp.float32))
        t = (jax.random.uniform(k2, shape) > 0.5).astype(jnp.float32)
        return p, t

    keys = jax.random.split(key, 3)
    cases = [
        make_case(keys[0], (2, 4, 16, 16)),   # module-scale shape, single block
        make_case(keys[1], (4, 8, 64, 64)),   # multi-step pipelined grid
        make_case(keys[2], (7, 11, 13)),      # ragged: n % 128 != 0 (prefix + XLA tail)
    ]

    for inputs, targets in cases:
        out = jax.block_until_ready(focal_loss(inputs, targets))
        ref = _focal_loss_ref(inputs, targets)
        assert out.shape == inputs.shape
        assert out.dtype == inputs.dtype
        assert jnp.allclose(out, ref, atol=1e-5, rtol=1e-5), "mismatch vs reference"

    # Opt-in binary-target fast path (single log) must match for hard targets.
    inputs, targets = cases[0]
    out_fast = jax.block_until_ready(focal_loss(inputs, targets, binary_targets=True))
    assert jnp.allclose(out_fast, _focal_loss_ref(inputs, targets), atol=1e-5, rtol=1e-5)

    print("KERNEL_OK")
</pallas_src>

<mosaic_0001>
module attributes {stable_mosaic.version = 11 : i64} {
  func.func @_focal_loss_kernel(%arg0: i32, %arg1: memref<2x1024xf32, #tpu.memory_space<vmem>>, %arg2: memref<2x1024xf32, #tpu.memory_space<vmem>>, %arg3: memref<2x1024xf32, #tpu.memory_space<vmem>>) attributes {dimension_semantics = [#tpu.dimension_semantics<parallel>], iteration_bounds = array<i64: 1>, scalar_prefetch = 0 : i64, scratch_operands = 0 : i64, tpu.core_type = #tpu.core_type<tc>, window_params = [{transform_indices = @transform_0, window_bounds = array<i64: 2, 1024>}, {transform_indices = @transform_1, window_bounds = array<i64: 2, 1024>}, {transform_indices = @transform_2, window_bounds = array<i64: 2, 1024>}]} {
    %c0 = arith.constant 0 : index
    %c0_0 = arith.constant 0 : index
    %0 = vector.load %arg1[%c0, %c0_0] : memref<2x1024xf32, #tpu.memory_space<vmem>>, vector<2x1024xf32>
    %c0_1 = arith.constant 0 : index
    %c0_2 = arith.constant 0 : index
    %1 = vector.load %arg2[%c0_1, %c0_2] : memref<2x1024xf32, #tpu.memory_space<vmem>>, vector<2x1024xf32>
    %cst = arith.constant 1.000000e+00 : f32
    %2 = vector.broadcast %cst : f32 to vector<2x1024xf32>
    %3 = arith.subf %2, %0 : vector<2x1024xf32>
    %4 = arith.subf %0, %3 : vector<2x1024xf32>
    %5 = arith.mulf %4, %1 : vector<2x1024xf32>
    %6 = arith.addf %3, %5 : vector<2x1024xf32>
    %cst_3 = arith.constant 1.000000e+00 : f32
    %7 = vector.broadcast %cst_3 : f32 to vector<2x1024xf32>
    %8 = arith.subf %7, %1 : vector<2x1024xf32>
    %9 = math.log %0 : vector<2x1024xf32>
    %cst_4 = arith.constant -1.000000e+02 : f32
    %10 = vector.broadcast %cst_4 : f32 to vector<2x1024xf32>
    %11 = arith.maximumf %9, %10 : vector<2x1024xf32>
    %12 = math.log %3 : vector<2x1024xf32>
    %cst_5 = arith.constant -1.000000e+02 : f32
    %13 = vector.broadcast %cst_5 : f32 to vector<2x1024xf32>
    %14 = arith.maximumf %12, %13 : vector<2x1024xf32>
    %15 = arith.mulf %1, %11 : vector<2x1024xf32>
    %16 = arith.mulf %8, %14 : vector<2x1024xf32>
    %17 = arith.addf %15, %16 : vector<2x1024xf32>
    %cst_6 = arith.constant 1.000000e+00 : f32
    %18 = vector.broadcast %cst_6 : f32 to vector<2x1024xf32>
    %19 = arith.subf %18, %6 : vector<2x1024xf32>
    %20 = arith.mulf %19, %19 : vector<2x1024xf32>
    %cst_7 = arith.constant 5.000000e-01 : f32
    %21 = vector.broadcast %cst_7 : f32 to vector<2x1024xf32>
    %22 = arith.mulf %21, %1 : vector<2x1024xf32>
    %cst_8 = arith.constant -7.500000e-01 : f32
    %23 = vector.broadcast %cst_8 : f32 to vector<2x1024xf32>
    %24 = arith.addf %23, %22 : vector<2x1024xf32>
    %25 = arith.mulf %17, %24 : vector<2x1024xf32>
    %26 = arith.mulf %25, %20 : vector<2x1024xf32>
    %c0_9 = arith.constant 0 : index
    %c0_10 = arith.constant 0 : index
    %27 = vector.load %arg3[%c0_9, %c0_10] : memref<2x1024xf32, #tpu.memory_space<vmem>>, vector<2x1024xf32>
    tpu.vector_store %arg3[%c0_9, %c0_10], %26 {strides = array<i32>} : memref<2x1024xf32, #tpu.memory_space<vmem>>, vector<2x1024xf32>,
    return
  }
  func.func @transform_0(%arg0: i32) -> (i32, i32) {
    %c0_i32 = arith.constant 0 : i32
    %c0_i32_0 = arith.constant 0 : i32
    return %arg0, %c0_i32 : i32, i32
  }
  func.func @transform_1(%arg0: i32) -> (i32, i32) {
    %c0_i32 = arith.constant 0 : i32
    %c0_i32_0 = arith.constant 0 : i32
    return %arg0, %c0_i32 : i32, i32
  }
  func.func @transform_2(%arg0: i32) -> (i32, i32) {
    %c0_i32 = arith.constant 0 : i32
    %c0_i32_0 = arith.constant 0 : i32
    return %arg0, %c0_i32 : i32, i32
  }
}

</mosaic_0001>

<llo_original>
// kernel: tpu_custom_call.1
$region0: #{tpu_custom_call.1}
  #allocation0 [shape = 'u32[]', space=smem, size = 0x4, offset = 0x4, fixed_abs, tag = 'smem constant byte address 0x4 - core index']
  #allocation1 [shape = 'u32[144,128]{1,0:T(1,128)}', space=vmem, size = 0x12000, scoped, tag = 'internal scratch']
  %s0 = inlined_call_operand.hbm [shape: f32[2,1024], index: 0, kind: input, shape index: {}]
  %s1 = inlined_call_operand.hbm [shape: f32[2,1024], index: 1, kind: input, shape index: {}]
  %s2 = inlined_call_operand.hbm [shape: f32[2,1024], index: 2, kind: output, shape index: {}]
  %s3 = sld [smem:[#allocation0]]
  $region26: #{tpu_custom_call.1} parent=0
    _
  %s5 = ssub.s32 1, %s3
  %s6 = scalar_select 0, %s5, %s3
  $region1: #{tpu_custom_call.1} parent=0
    #allocation2 [shape = 'u8[8192]{0}', space=vmem, size = 0x2000, scoped, tag = 'input window, operand 0, single buffered']
    #allocation3 [shape = 's32[1]{0}', space=sflag, size = 0x4, scoped, tag = 'scoped memory for tpu_custom_call.1']
    #allocation4 [shape = 's32[1]{0}', space=sflag, size = 0x4, scoped, tag = 'scoped memory for tpu_custom_call.1']
    #allocation5 [shape = 'u8[8192]{0}', space=vmem, size = 0x2000, scoped, tag = 'input window, operand 1, single buffered']
    #allocation6 [shape = 's32[1]{0}', space=sflag, size = 0x4, scoped, tag = 'scoped memory for tpu_custom_call.1']
    #allocation7 [shape = 'u8[8192]{0}', space=vmem, size = 0x2000, scoped, tag = 'output window, operand 0, single buffered']
    %7 = vsyncpa [#allocation3], 0
    %8 = vsyncpa [#allocation6], 0
    %9 = vsyncpa [#allocation4], 0
    // Predicated region
    $region2: #{tpu_custom_call.1} parent=1 // pred_check
      _
    $region3: #{tpu_custom_call.1} parent=1 // pred_check_branch
      %11 = sbr.rel (0) target = $region5
    $region4: #{tpu_custom_call.1} parent=1 // pred_region
      %s13 = ssub.s32 256, 256
      %14 = vsyncadd [#allocation3], %s13
      %s16 = sshll.u32 [#allocation2], 4
      %s17 = int_to_ptr.vmem [resolvable:$true] %s16
      %19 = dma.hbm_to_vmem [thread:$0]  %s0, 256, %s17, [#allocation3]
    $region5: #{tpu_custom_call.1} parent=1 // pred_fallthru
      _
    // Predicated region
    $region6: #{tpu_custom_call.1} parent=1 // pred_check
      _
    $region7: #{tpu_custom_call.1} parent=1 // pred_check_branch
      %21 = sbr.rel (0) target = $region9
    $region8: #{tpu_custom_call.1} parent=1 // pred_region
      %s23 = ssub.s32 256, 256
      %24 = vsyncadd [#allocation6], %s23
      %s26 = sshll.u32 [#allocation5], 4
      %s27 = int_to_ptr.vmem [resolvable:$true] %s26
      %29 = dma.hbm_to_vmem [thread:$0]  %s1, 256, %s27, [#allocation6]
    $region9: #{tpu_custom_call.1} parent=1 // pred_fallthru
      _
    // Predicated region
    $region10: #{tpu_custom_call.1} parent=1 // pred_check
      _
    $region11: #{tpu_custom_call.1} parent=1 // pred_check_branch
      %31 = sbr.rel (0) target = $region13
    $region12: #{tpu_custom_call.1} parent=1 // pred_region
      %32 = dma.done [#allocation3], 256
    $region13: #{tpu_custom_call.1} parent=1 // pred_fallthru
      _
    // Predicated region
    $region14: #{tpu_custom_call.1} parent=1 // pred_check
      _
    $region15: #{tpu_custom_call.1} parent=1 // pred_check_branch
      %34 = sbr.rel (0) target = $region17
    $region16: #{tpu_custom_call.1} parent=1 // pred_region
      %35 = dma.done [#allocation6], 256
    $region17: #{tpu_custom_call.1} parent=1 // pred_fallthru
      _
    %v36 = vld [vmem:[#allocation2] sm:$0xff]
    %v37 = vld [vmem:[#allocation2 + $0x8] sm:$0xff]
    %v38 = vld [vmem:[#allocation5] sm:$0xff]
    %v39 = vld [vmem:[#allocation5 + $0x8] sm:$0xff]
    %v40 = vsub.f32 1.0, %v36
    %v41 = vsub.f32 1.0, %v37
    %v42 = vsub.f32 %v36, %v40
    %v43 = vsub.f32 %v37, %v41
    %v44 = vmul.f32 %v42, %v38
    %v45 = vmul.f32 %v43, %v39
    %v46 = vadd.f32 %v40, %v44
    %v47 = vadd.f32 %v41, %v45
    %v48 = vsub.f32 1.0, %v38
    %v49 = vsub.f32 1.0, %v39
    %v50 = vlog2.pop %v36
    %v51 = vmul.f32 %v50, 0.6931472
    %v52 = vlog2.pop %v37
    %v53 = vmul.f32 %v52, 0.6931472
    %v54 = vmax.f32 %v51, -100.0
    %v55 = vmax.f32 %v53, -100.0
    %v56 = vlog2.pop %v40
    %v57 = vmul.f32 %v56, 0.6931472
    %v58 = vlog2.pop %v41
    %v59 = vmul.f32 %v58, 0.6931472
    %v60 = vmax.f32 %v57, -100.0
    %v61 = vmax.f32 %v59, -100.0
    %v62 = vmul.f32 %v38, %v54
    %v63 = vmul.f32 %v39, %v55
    %v64 = vmul.f32 %v48, %v60
    %v65 = vmul.f32 %v49, %v61
    %v66 = vadd.f32 %v62, %v64
    %v67 = vadd.f32 %v63, %v65
    %v68 = vsub.f32 1.0, %v46
    %v69 = vsub.f32 1.0, %v47
    %v70 = vmul.f32 %v68, %v68
    %v71 = vmul.f32 %v69, %v69
    %v72 = vmul.f32 %v38, 0.5
    %v73 = vmul.f32 %v39, 0.5
    %v74 = vadd.f32 %v72, -0.75
    %v75 = vadd.f32 %v73, -0.75
    %v76 = vmul.f32 %v66, %v74
    %v77 = vmul.f32 %v67, %v75
    %v78 = vmul.f32 %v76, %v70
    %v79 = vmul.f32 %v77, %v71
    %80 = vst [vmem:[#allocation7] sm:$0xff] %v78
    %81 = vst [vmem:[#allocation7 + $0x8] sm:$0xff] %v79
    // Predicated region
    $region18: #{tpu_custom_call.1} parent=1 // pred_check
      _
    $region19: #{tpu_custom_call.1} parent=1 // pred_check_branch
      %83 = sbr.rel (0) target = $region21
    $region20: #{tpu_custom_call.1} parent=1 // pred_region
      %s85 = ssub.s32 256, 256
      %86 = vsyncadd [#allocation4], %s85
      %s88 = sshll.u32 [#allocation7], 4
      %s89 = int_to_ptr.vmem [resolvable:$true] %s88
      %91 = dma.vmem_to_hbm [thread:$0]  %s89, 256, %s2, [#allocation4]
    $region21: #{tpu_custom_call.1} parent=1 // pred_fallthru
      _
    // Predicated region
    $region22: #{tpu_custom_call.1} parent=1 // pred_check
      _
    $region23: #{tpu_custom_call.1} parent=1 // pred_check_branch
      %93 = sbr.rel (0) target = $region25
    $region24: #{tpu_custom_call.1} parent=1 // pred_region
      %94 = dma.done [#allocation4], 256
    $region25: #{tpu_custom_call.1} parent=1 // pred_fallthru
      _
    %95 = vsyncpa [#allocation3], 1
    %96 = vsyncpa [#allocation6], 1
    %97 = vsyncpa [#allocation4], 1

</llo_original>
